<compile_context>
chip_gen: v5e
topology: v5e:2x2
jax: 0.10.0
libtpu: 0.0.40
codegen_flags: <defaults>
</compile_context>

<pallas_src>
import functools

import jax
import jax.numpy as jnp
import numpy as np
from jax.experimental import pallas as pl
from jax.experimental.pallas import tpu as pltpu


# ----------------------------------------------------------------------------
# Pallas kernel: whole XceptionBlock forward for the whole (tiny) batch.
#   x_ref    : (B*H, W*Cin)            lane-packed input (ReLU'd in-kernel)
#   wA_ref   : (4*W*Cin, 2*W*Cout)     fused [sepconv1 taps | skip 1x1], BN scales folded
#   wB_ref   : (3*W*Cout, W*Cout)      fused sepconv2 taps, BN2 scale folded
#   bias_ref : (2, W*Cout)             row 0 = BN1 shift (tiled), row 1 = BN2+skipBN shift
#   out_ref  : (B*H, W*Cout)           lane-dense output slab
# ----------------------------------------------------------------------------
def xception_block_kernel(x_ref, wA_ref, wB_ref, bias_ref, out_ref, *, H, WCout):
    HT = x_ref.shape[0]                                   # B*H rows on the sublane axis
    x = x_ref[...]                                        # (HT, W*Cin)

    biases = bias_ref[...]                                # (2, W*Cout)
    b1 = biases[0:1, :]                                   # (1, W*Cout)
    bfin = biases[1:2, :]                                 # (1, W*Cout)

    # Hoisted image-boundary masks (per batch element on the sublane axis).
    row = jax.lax.broadcasted_iota(jnp.int32, (HT, 1), 0)
    keep_top = (row % H != 0).astype(jnp.float32)         # zero the dy=-1 tap on row 0
    keep_bot = (row % H != H - 1).astype(jnp.float32)     # zero the dy=+1 tap on row H-1

    def shifted(act):
        # dy = -1 : up[h] = act[h-1];  dy = +1 : dn[h] = act[h+1]; boundary rows zeroed.
        up = pltpu.roll(act, shift=1, axis=0) * keep_top
        dn = pltpu.roll(act, shift=HT - 1, axis=0) * keep_bot
        return up, dn

    # ---- rep[0]: ReLU ----
    a = jnp.maximum(x, 0.0)

    # ---- rep[1..2] (SepConv 4->8 + BN1 scale) fused with skip (1x1 conv + BN scale):
    # one MXU matmul, K = 4*W*Cin (3 dy taps of the ReLU'd input + raw input for skip),
    # N = 2*W*Cout (first half = conv1 pre-bias, second half = skip branch).
    up_a, dn_a = shifted(a)
    lhsA = jnp.concatenate([up_a, a, dn_a, x], axis=-1)   # (HT, 4*W*Cin)
    resA = jnp.dot(lhsA, wA_ref[...], preferred_element_type=jnp.float32)
    t1 = resA[:, :WCout]                                  # (HT, W*Cout)
    sk = resA[:, WCout:]                                  # (HT, W*Cout)

    # ---- rep[3]: ReLU (BN1 shift applied first) ----
    a2 = jnp.maximum(t1 + b1, 0.0)

    # ---- rep[4..5]: SepConv(8->8) + BN2 scale, one matmul with K = 3*W*Cout ----
    up2, dn2 = shifted(a2)
    lhsB = jnp.concatenate([up2, a2, dn2], axis=-1)       # (HT, 3*W*Cout)
    t2 = jnp.dot(lhsB, wB_ref[...], preferred_element_type=jnp.float32)

    # ---- residual add (BN2 + skipBN shifts folded into bfin) ----
    out_ref[...] = (t2 + sk + bfin).astype(out_ref.dtype)


# ----------------------------------------------------------------------------
# Wrapper: single grid step; whole problem fits comfortably in VMEM (<1 MiB).
# TODO(synk): the banded-weight trick scales as O(W^2 * C^2); for much larger W,
# tile W and/or set pipeline_mode=pl.Buffered(1) on the constant weight specs.
# ----------------------------------------------------------------------------
def xception_block(x_flat, wA, wB, biases, H):
    BH, WCin = x_flat.shape
    WCout = wB.shape[1]

    kernel = functools.partial(xception_block_kernel, H=H, WCout=WCout)

    return pl.pallas_call(
        kernel,
        out_shape=jax.ShapeDtypeStruct((BH, WCout), jnp.float32),
        grid_spec=pltpu.PrefetchScalarGridSpec(
            num_scalar_prefetch=0,
            grid=(1,),
            in_specs=[
                pl.BlockSpec((BH, WCin), lambda i: (0, 0)),
                pl.BlockSpec((4 * WCin, 2 * WCout), lambda i: (0, 0)),
                pl.BlockSpec((3 * WCout, WCout), lambda i: (0, 0)),
                pl.BlockSpec((2, WCout), lambda i: (0, 0)),
            ],
            out_specs=pl.BlockSpec((BH, WCout), lambda i: (0, 0)),
        ),
        compiler_params=pltpu.CompilerParams(
            dimension_semantics=("arbitrary",)),
    )(x_flat, wA, wB, biases)


# ----------------------------------------------------------------------------
# Host-side weight folding:
#   - BN scales folded into pointwise / skip weights.
#   - depthwise x pointwise fused per (dy, dx) tap.
#   - dx taps + W-edge zero padding baked into banded matrices.
#   - the three dy taps stacked along K; skip 1x1 appended as extra K rows / N cols.
# ----------------------------------------------------------------------------
def fold_and_pack(params, W):
    Cin, Cout = params["pw1"].shape
    WCin, WCout = W * Cin, W * Cout

    def banded(dw, pw, scale):
        dw = np.asarray(dw, np.float32)                               # (3, 3, C_in)
        pw = np.asarray(pw, np.float32) * np.asarray(scale, np.float32).reshape(1, -1)
        C_in, C_out = pw.shape
        big = np.zeros((3, W * C_in, W * C_out), np.float32)
        for ky in range(3):                                           # dy = ky - 1
            for w in range(W):
                for dx in (-1, 0, 1):
                    ws = w + dx
                    if 0 <= ws < W:
                        tap = dw[ky, dx + 1][:, None] * pw            # (C_in, C_out)
                        big[ky, ws * C_in:(ws + 1) * C_in,
                            w * C_out:(w + 1) * C_out] = tap
        return big.reshape(3 * W * C_in, W * C_out)                   # taps stacked on K

    w1b = banded(params["dw1"], params["pw1"], params["s1"])          # (3*WCin,  WCout)
    w2b = banded(params["dw2"], params["pw2"], params["s2"])          # (3*WCout, WCout)

    skw = (np.asarray(params["skw"], np.float32)
           * np.asarray(params["ss"], np.float32).reshape(1, -1))
    skipb = np.zeros((WCin, WCout), np.float32)
    for w in range(W):
        skipb[w * Cin:(w + 1) * Cin, w * Cout:(w + 1) * Cout] = skw

    # Fused conv1 + skip weight: block matrix [[w1_taps, 0], [0, skip]].
    wA = np.zeros((4 * WCin, 2 * WCout), np.float32)
    wA[:3 * WCin, :WCout] = w1b
    wA[3 * WCin:, WCout:] = skipb

    b1 = np.tile(np.asarray(params["b1"], np.float32).reshape(-1), W)
    bfin = np.tile((np.asarray(params["b2"], np.float32)
                    + np.asarray(params["sb"], np.float32)).reshape(-1), W)
    biases = np.stack([b1, bfin], axis=0).astype(np.float32)          # (2, W*Cout)

    return jnp.asarray(wA), jnp.asarray(w2b), jnp.asarray(biases)


# ----------------------------------------------------------------------------
# Pure-JAX reference (NHWC, unfolded params) for validation.
# ----------------------------------------------------------------------------
def reference(x, p):
    def sepconv(a, dw, pw):
        C = a.shape[-1]
        y = jax.lax.conv_general_dilated(
            a, dw.reshape(3, 3, 1, C), window_strides=(1, 1),
            padding=((1, 1), (1, 1)),
            dimension_numbers=("NHWC", "HWIO", "NHWC"),
            feature_group_count=C)
        return jnp.einsum("bhwc,cd->bhwd", y, pw)

    t = jnp.maximum(x, 0.0)
    t = sepconv(t, p["dw1"], p["pw1"]) * p["s1"] + p["b1"]
    t = jnp.maximum(t, 0.0)
    t = sepconv(t, p["dw2"], p["pw2"]) * p["s2"] + p["b2"]
    skip = jnp.einsum("bhwc,cd->bhwd", x, p["skw"]) * p["ss"] + p["sb"]
    return t + skip


# ----------------------------------------------------------------------------
def make_params(key, cin, cout):
    ks = jax.random.split(key, 20)

    def bn_fold(k0, k1, k2, k3, c):
        gamma = jax.random.uniform(k0, (c,), minval=0.5, maxval=1.5)
        beta = 0.1 * jax.random.normal(k1, (c,))
        mean = 0.1 * jax.random.normal(k2, (c,))
        var = jax.random.uniform(k3, (c,), minval=0.5, maxval=1.5)
        scale = gamma / jnp.sqrt(var + 1e-5)
        shift = beta - mean * scale
        return (scale.reshape(1, c).astype(jnp.float32),
                shift.reshape(1, c).astype(jnp.float32))

    p = {}
    p["dw1"] = 0.2 * jax.random.normal(ks[0], (3, 3, cin), dtype=jnp.float32)
    p["pw1"] = 0.2 * jax.random.normal(ks[1], (cin, cout), dtype=jnp.float32)
    p["s1"], p["b1"] = bn_fold(ks[2], ks[3], ks[4], ks[5], cout)
    p["dw2"] = 0.2 * jax.random.normal(ks[6], (3, 3, cout), dtype=jnp.float32)
    p["pw2"] = 0.2 * jax.random.normal(ks[7], (cout, cout), dtype=jnp.float32)
    p["s2"], p["b2"] = bn_fold(ks[8], ks[9], ks[10], ks[11], cout)
    p["skw"] = 0.2 * jax.random.normal(ks[12], (cin, cout), dtype=jnp.float32)
    p["ss"], p["sb"] = bn_fold(ks[13], ks[14], ks[15], ks[16], cout)
    return p


if __name__ == "__main__":
    B, Cin, H, W = 2, 4, 16, 16
    Cout = 8

    key = jax.random.PRNGKey(0)
    k_x, k_p = jax.random.split(key)

    # PyTorch-style NCHW input -> NHWC -> collapsed lane-packed (B*H, W*Cin) slab.
    x_nchw = jax.random.normal(k_x, (B, Cin, H, W), dtype=jnp.float32)
    x_nhwc = jnp.transpose(x_nchw, (0, 2, 3, 1))
    x_flat = x_nhwc.reshape(B * H, W * Cin)

    params = make_params(k_p, Cin, Cout)
    wA, wB, biases = fold_and_pack(params, W)

    out_flat = xception_block(x_flat, wA, wB, biases, H)
    out_flat = jax.block_until_ready(out_flat)
    out_nhwc = out_flat.reshape(B, H, W, Cout)

    ref = jax.block_until_ready(reference(x_nhwc, params))
    np.testing.assert_allclose(np.asarray(out_nhwc), np.asarray(ref),
                               rtol=1e-4, atol=2e-4)

    # back to NCHW if the caller wants PyTorch layout
    _ = jnp.transpose(out_nhwc, (0, 3, 1, 2))

    print("KERNEL_OK")
</pallas_src>

<mosaic_0001>
module attributes {stable_mosaic.version = 11 : i64} {
  func.func @xception_block_kernel(%arg0: i32, %arg1: memref<32x64xf32, #tpu.memory_space<vmem>>, %arg2: memref<256x256xf32, #tpu.memory_space<vmem>>, %arg3: memref<384x128xf32, #tpu.memory_space<vmem>>, %arg4: memref<2x128xf32, #tpu.memory_space<vmem>>, %arg5: memref<32x128xf32, #tpu.memory_space<vmem>>) attributes {dimension_semantics = [#tpu.dimension_semantics<arbitrary>], iteration_bounds = array<i64: 1>, scalar_prefetch = 0 : i64, scratch_operands = 0 : i64, tpu.core_type = #tpu.core_type<tc>, window_params = [{pipeline_mode = #tpu.pipeline_mode<synchronous>, transform_indices = @transform_0, window_bounds = array<i64: 32, 64>}, {pipeline_mode = #tpu.pipeline_mode<synchronous>, transform_indices = @transform_1, window_bounds = array<i64: 256, 256>}, {pipeline_mode = #tpu.pipeline_mode<synchronous>, transform_indices = @transform_2, window_bounds = array<i64: 384, 128>}, {pipeline_mode = #tpu.pipeline_mode<synchronous>, transform_indices = @transform_3, window_bounds = array<i64: 2, 128>}, {pipeline_mode = #tpu.pipeline_mode<synchronous>, transform_indices = @transform_4, window_bounds = array<i64: 32, 128>}]} {
    %c0 = arith.constant 0 : index
    %c0_0 = arith.constant 0 : index
    %0 = vector.load %arg1[%c0, %c0_0] : memref<32x64xf32, #tpu.memory_space<vmem>>, vector<32x64xf32>
    %c0_1 = arith.constant 0 : index
    %c0_2 = arith.constant 0 : index
    %1 = vector.load %arg4[%c0_1, %c0_2] : memref<2x128xf32, #tpu.memory_space<vmem>>, vector<2x128xf32>
    %2 = vector.extract_strided_slice %1 {offsets = [0, 0], sizes = [1, 128], strides = [1, 1]} : vector<2x128xf32> to vector<1x128xf32>
    %3 = vector.extract_strided_slice %1 {offsets = [1, 0], sizes = [1, 128], strides = [1, 1]} : vector<2x128xf32> to vector<1x128xf32>
    %4 = tpu.iota {dimensions = array<i32: 0>} : vector<32x1xi32>
    %c16_i32 = arith.constant 16 : i32
    %c0_i32 = arith.constant 0 : i32
    %5 = arith.cmpi eq, %c16_i32, %c0_i32 : i32
    %c1_i32 = arith.constant 1 : i32
    %6 = arith.select %5, %c1_i32, %c16_i32 : i32
    %7 = vector.broadcast %6 : i32 to vector<32x1xi32>
    %8 = arith.remsi %4, %7 : vector<32x1xi32>
    %c0_i32_3 = arith.constant 0 : i32
    %9 = vector.broadcast %c0_i32_3 : i32 to vector<32x1xi32>
    %10 = arith.cmpi ne, %8, %9 : vector<32x1xi32>
    %c0_i32_4 = arith.constant 0 : i32
    %11 = vector.broadcast %c0_i32_4 : i32 to vector<32x1xi32>
    %12 = arith.cmpi slt, %8, %11 : vector<32x1xi32>
    %c0_i32_5 = arith.constant 0 : i32
    %13 = arith.cmpi slt, %6, %c0_i32_5 : i32
    %14 = vector.broadcast %13 : i1 to vector<32x1xi1>
    %15 = vector.broadcast %14 : vector<32x1xi1> to vector<32x1xi1>
    %16 = arith.xori %12, %15 : vector<32x1xi1>
    %17 = arith.andi %16, %10 : vector<32x1xi1>
    %18 = vector.broadcast %6 : i32 to vector<32x1xi32>
    %19 = arith.addi %8, %18 : vector<32x1xi32>
    %20 = arith.select %17, %19, %8 : vector<32x1xi1>, vector<32x1xi32>
    %c0_i32_6 = arith.constant 0 : i32
    %21 = vector.broadcast %c0_i32_6 : i32 to vector<32x1xi32>
    %22 = arith.cmpi ne, %20, %21 : vector<32x1xi32>
    %23 = arith.extui %22 : vector<32x1xi1> to vector<32x1xi32>
    %24 = arith.sitofp %23 : vector<32x1xi32> to vector<32x1xf32>
    %c16_i32_7 = arith.constant 16 : i32
    %c0_i32_8 = arith.constant 0 : i32
    %25 = arith.cmpi eq, %c16_i32_7, %c0_i32_8 : i32
    %c1_i32_9 = arith.constant 1 : i32
    %26 = arith.select %25, %c1_i32_9, %c16_i32_7 : i32
    %27 = vector.broadcast %26 : i32 to vector<32x1xi32>
    %28 = arith.remsi %4, %27 : vector<32x1xi32>
    %c0_i32_10 = arith.constant 0 : i32
    %29 = vector.broadcast %c0_i32_10 : i32 to vector<32x1xi32>
    %30 = arith.cmpi ne, %28, %29 : vector<32x1xi32>
    %c0_i32_11 = arith.constant 0 : i32
    %31 = vector.broadcast %c0_i32_11 : i32 to vector<32x1xi32>
    %32 = arith.cmpi slt, %28, %31 : vector<32x1xi32>
    %c0_i32_12 = arith.constant 0 : i32
    %33 = arith.cmpi slt, %26, %c0_i32_12 : i32
    %34 = vector.broadcast %33 : i1 to vector<32x1xi1>
    %35 = vector.broadcast %34 : vector<32x1xi1> to vector<32x1xi1>
    %36 = arith.xori %32, %35 : vector<32x1xi1>
    %37 = arith.andi %36, %30 : vector<32x1xi1>
    %38 = vector.broadcast %26 : i32 to vector<32x1xi32>
    %39 = arith.addi %28, %38 : vector<32x1xi32>
    %40 = arith.select %37, %39, %28 : vector<32x1xi1>, vector<32x1xi32>
    %c15_i32 = arith.constant 15 : i32
    %41 = vector.broadcast %c15_i32 : i32 to vector<32x1xi32>
    %42 = arith.cmpi ne, %40, %41 : vector<32x1xi32>
    %43 = arith.extui %42 : vector<32x1xi1> to vector<32x1xi32>
    %44 = arith.sitofp %43 : vector<32x1xi32> to vector<32x1xf32>
    %cst = arith.constant 0.000000e+00 : f32
    %45 = vector.broadcast %cst : f32 to vector<32x64xf32>
    %46 = arith.maximumf %0, %45 : vector<32x64xf32>
    %c1_i32_13 = arith.constant 1 : i32
    %47 = tpu.dynamic_rotate %46 by %c1_i32_13 dim 0 : vector<32x64xf32>, i32 -> vector<32x64xf32>
    %48 = vector.broadcast %24 : vector<32x1xf32> to vector<32x64xf32>
    %49 = arith.mulf %47, %48 : vector<32x64xf32>
    %c31_i32 = arith.constant 31 : i32
    %50 = tpu.dynamic_rotate %46 by %c31_i32 dim 0 : vector<32x64xf32>, i32 -> vector<32x64xf32>
    %51 = vector.broadcast %44 : vector<32x1xf32> to vector<32x64xf32>
    %52 = arith.mulf %50, %51 : vector<32x64xf32>
    %53 = tpu.concatenate %49, %46, %52, %0 in 1 : vector<32x64xf32>, vector<32x64xf32>, vector<32x64xf32>, vector<32x64xf32> -> vector<32x256xf32>
    %c0_14 = arith.constant 0 : index
    %c0_15 = arith.constant 0 : index
    %54 = vector.load %arg2[%c0_14, %c0_15] : memref<256x256xf32, #tpu.memory_space<vmem>>, vector<256x256xf32>
    %cst_16 = arith.constant dense<0.000000e+00> : vector<32x256xf32>
    %55 = tpu.matmul %53, %54, %cst_16 {dimension_numbers = #tpu.dot_dimension_numbers<[1], [0], [0], [1], [0, 0, 1, 1], [], []>} : vector<32x256xf32>, vector<256x256xf32>, vector<32x256xf32> -> vector<32x256xf32>
    %56 = vector.extract_strided_slice %55 {offsets = [0, 0], sizes = [32, 128], strides = [1, 1]} : vector<32x256xf32> to vector<32x128xf32>
    %57 = vector.extract_strided_slice %55 {offsets = [0, 128], sizes = [32, 128], strides = [1, 1]} : vector<32x256xf32> to vector<32x128xf32>
    %58 = vector.broadcast %2 : vector<1x128xf32> to vector<32x128xf32>
    %59 = arith.addf %56, %58 : vector<32x128xf32>
    %cst_17 = arith.constant 0.000000e+00 : f32
    %60 = vector.broadcast %cst_17 : f32 to vector<32x128xf32>
    %61 = arith.maximumf %59, %60 : vector<32x128xf32>
    %c1_i32_18 = arith.constant 1 : i32
    %62 = tpu.dynamic_rotate %61 by %c1_i32_18 dim 0 : vector<32x128xf32>, i32 -> vector<32x128xf32>
    %63 = vector.broadcast %24 : vector<32x1xf32> to vector<32x128xf32>
    %64 = arith.mulf %62, %63 : vector<32x128xf32>
    %c31_i32_19 = arith.constant 31 : i32
    %65 = tpu.dynamic_rotate %61 by %c31_i32_19 dim 0 : vector<32x128xf32>, i32 -> vector<32x128xf32>
    %66 = vector.broadcast %44 : vector<32x1xf32> to vector<32x128xf32>
    %67 = arith.mulf %65, %66 : vector<32x128xf32>
    %68 = tpu.concatenate %64, %61, %67 in 1 : vector<32x128xf32>, vector<32x128xf32>, vector<32x128xf32> -> vector<32x384xf32>
    %c0_20 = arith.constant 0 : index
    %c0_21 = arith.constant 0 : index
    %69 = vector.load %arg3[%c0_20, %c0_21] : memref<384x128xf32, #tpu.memory_space<vmem>>, vector<384x128xf32>
    %cst_22 = arith.constant dense<0.000000e+00> : vector<32x128xf32>
    %70 = tpu.matmul %68, %69, %cst_22 {dimension_numbers = #tpu.dot_dimension_numbers<[1], [0], [0], [1], [0, 0, 1, 1], [], []>} : vector<32x384xf32>, vector<384x128xf32>, vector<32x128xf32> -> vector<32x128xf32>
    %71 = arith.addf %70, %57 : vector<32x128xf32>
    %72 = vector.broadcast %3 : vector<1x128xf32> to vector<32x128xf32>
    %73 = arith.addf %71, %72 : vector<32x128xf32>
    %c0_23 = arith.constant 0 : index
    %c0_24 = arith.constant 0 : index
    %74 = vector.load %arg5[%c0_23, %c0_24] : memref<32x128xf32, #tpu.memory_space<vmem>>, vector<32x128xf32>
    tpu.vector_store %arg5[%c0_23, %c0_24], %73 {strides = array<i32>} : memref<32x128xf32, #tpu.memory_space<vmem>>, vector<32x128xf32>,
    return
  }
  func.func @transform_0(%arg0: i32) -> (i32, i32) {
    %c0_i32 = arith.constant 0 : i32
    %c0_i32_0 = arith.constant 0 : i32
    %c0_i32_1 = arith.constant 0 : i32
    return %c0_i32, %c0_i32_0 : i32, i32
  }
  func.func @transform_1(%arg0: i32) -> (i32, i32) {
    %c0_i32 = arith.constant 0 : i32
    %c0_i32_0 = arith.constant 0 : i32
    %c0_i32_1 = arith.constant 0 : i32
    return %c0_i32, %c0_i32_0 : i32, i32
  }
  func.func @transform_2(%arg0: i32) -> (i32, i32) {
    %c0_i32 = arith.constant 0 : i32
    %c0_i32_0 = arith.constant 0 : i32
    %c0_i32_1 = arith.constant 0 : i32
    return %c0_i32, %c0_i32_0 : i32, i32
  }
  func.func @transform_3(%arg0: i32) -> (i32, i32) {
    %c0_i32 = arith.constant 0 : i32
    %c0_i32_0 = arith.constant 0 : i32
    %c0_i32_1 = arith.constant 0 : i32
    return %c0_i32, %c0_i32_0 : i32, i32
  }
  func.func @transform_4(%arg0: i32) -> (i32, i32) {
    %c0_i32 = arith.constant 0 : i32
    %c0_i32_0 = arith.constant 0 : i32
    %c0_i32_1 = arith.constant 0 : i32
    return %c0_i32, %c0_i32_0 : i32, i32
  }
}

</mosaic_0001>

<llo_original>
// kernel: tpu_custom_call.1
$region0: #{tpu_custom_call.1}
  #allocation0 [shape = 'u32[]', space=smem, size = 0x4, offset = 0x4, fixed_abs, tag = 'smem constant byte address 0x4 - core index']
  #allocation1 [shape = 'u32[72,128]{1,0:T(1,128)}', space=vmem, size = 0x9000, scoped, tag = 'internal scratch']
  %s0 = inlined_call_operand.hbm [shape: f32[32,64], index: 0, kind: input, shape index: {}]
  %s1 = inlined_call_operand.hbm [shape: f32[256,256], index: 1, kind: input, shape index: {}]
  %s2 = inlined_call_operand.hbm [shape: f32[384,128], index: 2, kind: input, shape index: {}]
  %s3 = inlined_call_operand.vmem [shape: f32[2,128], index: 3, kind: input, shape index: {}]
  %s4 = inlined_call_operand.hbm [shape: f32[32,128], index: 4, kind: output, shape index: {}]
  %s5 = sld [smem:[#allocation0]]
  $region38: #{tpu_custom_call.1} parent=0
    _
  %s7 = ssub.s32 1, %s5
  %s8 = scalar_select 0, %s7, %s5
  $region1: #{tpu_custom_call.1} parent=0
    #allocation2 [shape = 'u8[16384]{0}', space=vmem, size = 0x4000, scoped, tag = 'input window, operand 0, single buffered']
    #allocation3 [shape = 's32[1]{0}', space=sflag, size = 0x4, scoped, tag = 'scoped memory for tpu_custom_call.1']
    #allocation4 [shape = 's32[1]{0}', space=sflag, size = 0x4, scoped, tag = 'scoped memory for tpu_custom_call.1']
    #allocation5 [shape = 'u8[262144]{0}', space=vmem, size = 0x40000, scoped, tag = 'input window, operand 1, single buffered']
    #allocation6 [shape = 's32[1]{0}', space=sflag, size = 0x4, scoped, tag = 'scoped memory for tpu_custom_call.1']
    #allocation7 [shape = 'u8[196608]{0}', space=vmem, size = 0x30000, scoped, tag = 'input window, operand 2, single buffered']
    #allocation8 [shape = 'u8[16384]{0}', space=vmem, size = 0x4000, scoped, tag = 'output window, operand 0, single buffered']
    %9 = vsyncpa [#allocation3], 0
    %10 = vsyncpa [#allocation6], 0
    %11 = vsyncpa [#allocation4], 0
    // Predicated region
    $region2: #{tpu_custom_call.1} parent=1 // pred_check
      _
    $region3: #{tpu_custom_call.1} parent=1 // pred_check_branch
      %13 = sbr.rel (0) target = $region5
    $region4: #{tpu_custom_call.1} parent=1 // pred_region
      %15 = vsyncadd [#allocation3], 0
      %s16 = sshll.u32 %s0, 4
      %s17 = int_to_ptr.hbm [resolvable:$true] %s16
      %s18 = sshll.u32 [#allocation2], 4
      %s19 = int_to_ptr.vmem [resolvable:$true] %s18
      %24 = dma.hbm_to_vmem [thread:$0]  %s17, 512, %s19, [#allocation3], 128, 128, 8
    $region5: #{tpu_custom_call.1} parent=1 // pred_fallthru
      _
    // Predicated region
    $region6: #{tpu_custom_call.1} parent=1 // pred_check
      _
    $region7: #{tpu_custom_call.1} parent=1 // pred_check_branch
      %26 = sbr.rel (0) target = $region9
    $region8: #{tpu_custom_call.1} parent=1 // pred_region
      %28 = vsyncadd [#allocation6], 0
      %s29 = sshll.u32 %s1, 4
      %s30 = int_to_ptr.hbm [resolvable:$true] %s29
      %s31 = sshll.u32 [#allocation5], 4
      %s32 = int_to_ptr.vmem [resolvable:$true] %s31
      %37 = dma.hbm_to_vmem [thread:$0]  %s30, 8192, %s32, [#allocation6], 256, 256, 16
    $region9: #{tpu_custom_call.1} parent=1 // pred_fallthru
      _
    // Predicated region
    $region10: #{tpu_custom_call.1} parent=1 // pred_check
      _
    $region11: #{tpu_custom_call.1} parent=1 // pred_check_branch
      %39 = sbr.rel (0) target = $region13
    $region12: #{tpu_custom_call.1} parent=1 // pred_region
      %41 = vsyncadd [#allocation6], 0
      %s42 = sshll.u32 %s2, 4
      %s43 = int_to_ptr.hbm [resolvable:$true] %s42
      %s44 = sshll.u32 [#allocation7], 4
      %s45 = int_to_ptr.vmem [resolvable:$true] %s44
      %50 = dma.hbm_to_vmem [thread:$0]  %s43, 6144, %s45, [#allocation6], 128, 128, 8
    $region13: #{tpu_custom_call.1} parent=1 // pred_fallthru
      _
    // Predicated region
    $region14: #{tpu_custom_call.1} parent=1 // pred_check
      _
    $region15: #{tpu_custom_call.1} parent=1 // pred_check_branch
      %52 = sbr.rel (0) target = $region17
    $region16: #{tpu_custom_call.1} parent=1 // pred_region
      _
    $region17: #{tpu_custom_call.1} parent=1 // pred_fallthru
      _
    // Predicated region
    $region18: #{tpu_custom_call.1} parent=1 // pred_check
      _
    $region19: #{tpu_custom_call.1} parent=1 // pred_check_branch
      %54 = sbr.rel (0) target = $region21
    $region20: #{tpu_custom_call.1} parent=1 // pred_region
      %56 = dma.done [#allocation3], 512
    $region21: #{tpu_custom_call.1} parent=1 // pred_fallthru
      _
    // Predicated region
    $region22: #{tpu_custom_call.1} parent=1 // pred_check
      _
    $region23: #{tpu_custom_call.1} parent=1 // pred_check_branch
      %58 = sbr.rel (0) target = $region25
    $region24: #{tpu_custom_call.1} parent=1 // pred_region
      %60 = dma.done [#allocation6], 8192
    $region25: #{tpu_custom_call.1} parent=1 // pred_fallthru
      _
    // Predicated region
    $region26: #{tpu_custom_call.1} parent=1 // pred_check
      _
    $region27: #{tpu_custom_call.1} parent=1 // pred_check_branch
      %62 = sbr.rel (0) target = $region29
    $region28: #{tpu_custom_call.1} parent=1 // pred_region
      %64 = dma.done [#allocation6], 6144
    $region29: #{tpu_custom_call.1} parent=1 // pred_fallthru
      _
    %v65 = vld [vmem:[#allocation2] sm:$0xff]
    %v66 = vld [vmem:[#allocation2 + $0x8] sm:$0xff]
    %v67 = vld [vmem:[#allocation2 + $0x10] sm:$0xff]
    %v68 = vld [vmem:[#allocation2 + $0x18] sm:$0xff]
    %v69 = vld [vmem:[%s3] sm:$0x3]
    %v70 = vlaneseq
    %v71 = vshrl.u32 %v70, 7
    %v72 = vadd.s32 %v71, 8
    %v73 = vadd.s32 %v71, 16
    %v74 = vadd.s32 %v71, 24
    %vm75 = vcmp.lt.s32.totalorder %v71, 0
    %v76 = vsub.s32 0, %v71
    %v77 = vsel %vm75, %v76, %v71
    %v78 = vshrl.u32 %v77, 4
    %v79 = vand.u32 %v77, 15
    %v80 = vsub.s32 0, %v79
    %v81 = vsel %vm75, %v80, %v79
    %vm82 = vcmp.lt.s32.totalorder %v72, 0
    %v83 = vsub.s32 0, %v72
    %v84 = vsel %vm82, %v83, %v72
    %v85 = vshrl.u32 %v84, 4
    %v86 = vand.u32 %v84, 15
    %v87 = vsub.s32 0, %v86
    %v88 = vsel %vm82, %v87, %v86
    %vm89 = vcmp.lt.s32.totalorder %v73, 0
    %v90 = vsub.s32 0, %v73
    %v91 = vsel %vm89, %v90, %v73
    %v92 = vshrl.u32 %v91, 4
    %v93 = vand.u32 %v91, 15
    %v94 = vsub.s32 0, %v93
    %v95 = vsel %vm89, %v94, %v93
    %vm96 = vcmp.lt.s32.totalorder %v74, 0
    %v97 = vsub.s32 0, %v74
    %v98 = vsel %vm96, %v97, %v74
    %v99 = vshrl.u32 %v98, 4
    %v100 = vand.u32 %v98, 15
    %v101 = vsub.s32 0, %v100
    %v102 = vsel %vm96, %v101, %v100
    %vm103 = vcmp.ne.s32.totalorder %v81, 0
    %vm104 = vcmp.ne.s32.totalorder %v88, 0
    %vm105 = vcmp.ne.s32.totalorder %v95, 0
    %vm106 = vcmp.ne.s32.totalorder %v102, 0
    %vm107 = vcmp.lt.s32.totalorder %v81, 0
    %vm108 = vcmp.lt.s32.totalorder %v88, 0
    %vm109 = vcmp.lt.s32.totalorder %v95, 0
    %vm110 = vcmp.lt.s32.totalorder %v102, 0
    %vm111 = vmand %vm107, %vm103
    %vm112 = vmand %vm108, %vm104
    %vm113 = vmand %vm109, %vm105
    %vm114 = vmand %vm110, %vm106
    %v115 = vadd.s32 %v81, 16
    %v116 = vadd.s32 %v88, 16
    %v117 = vadd.s32 %v95, 16
    %v118 = vadd.s32 %v102, 16
    %v119 = vsel %vm111, %v115, %v81
    %v120 = vsel %vm112, %v116, %v88
    %v121 = vsel %vm113, %v117, %v95
    %v122 = vsel %vm114, %v118, %v102
    %vm123 = vcmp.ne.s32.totalorder %v119, 0
    %vm124 = vcmp.ne.s32.totalorder %v120, 0
    %vm125 = vcmp.ne.s32.totalorder %v121, 0
    %vm126 = vcmp.ne.s32.totalorder %v122, 0
    %v127 = vsel %vm123, 1, 0
    %v128 = vsel %vm124, 1, 0
    %v129 = vsel %vm125, 1, 0
    %v130 = vsel %vm126, 1, 0
    %v131 = vcvt.s32.f32 %v127
    %v132 = vcvt.s32.f32 %v128
    %v133 = vcvt.s32.f32 %v129
    %v134 = vcvt.s32.f32 %v130
    %vm135 = vcmp.ne.s32.totalorder %v119, 15
    %vm136 = vcmp.ne.s32.totalorder %v120, 15
    %vm137 = vcmp.ne.s32.totalorder %v121, 15
    %vm138 = vcmp.ne.s32.totalorder %v122, 15
    %v139 = vsel %vm135, 1, 0
    %v140 = vsel %vm136, 1, 0
    %v141 = vsel %vm137, 1, 0
    %v142 = vsel %vm138, 1, 0
    %v143 = vcvt.s32.f32 %v139
    %v144 = vcvt.s32.f32 %v140
    %v145 = vcvt.s32.f32 %v141
    %v146 = vcvt.s32.f32 %v142
    %v147 = vmax.f32 %v65, 0.0
    %v148 = vmax.f32 %v66, 0.0
    %v149 = vmax.f32 %v67, 0.0
    %v150 = vmax.f32 %v68, 0.0
    %v151 = vrot.slane %v147, 7
    %v152 = vrot.slane %v148, 7
    %v153 = vrot.slane %v149, 7
    %v154 = vrot.slane %v150, 7
    %vm155 = vcmp.lt.s32.totalorder %v71, 1
    %v156 = vsel %vm155, %v153, %v154
    %v157 = vsel %vm155, %v152, %v153
    %v158 = vsel %vm155, %v151, %v152
    %v159 = vsel %vm155, %v154, %v151
    %v160 = vmul.f32 %v159, %v131
    %v161 = vmul.f32 %v158, %v132
    %v162 = vmul.f32 %v157, %v133
    %v163 = vmul.f32 %v156, %v134
    %v164 = vrot.slane %v147, 1
    %v165 = vrot.slane %v148, 1
    %v166 = vrot.slane %v149, 1
    %v167 = vrot.slane %v150, 1
    %vm168 = vcmp.lt.s32.totalorder %v71, 7
    %v169 = vsel %vm168, %v166, %v167
    %v170 = vsel %vm168, %v165, %v166
    %v171 = vsel %vm168, %v164, %v165
    %v172 = vsel %vm168, %v167, %v164
    %v173 = vmul.f32 %v171, %v143
    %v174 = vmul.f32 %v170, %v144
    %v175 = vmul.f32 %v169, %v145
    %v176 = vmul.f32 %v172, %v146
    %181 = vrot.lane.b32.xlu0 %v147, 64
    %v182 = vpop.permute.xlu0 %181
    %183 = vrot.lane.b32.xlu0 %v148, 64
    %v184 = vpop.permute.xlu0 %183
    %185 = vrot.lane.b32.xlu0 %v149, 64
    %v186 = vpop.permute.xlu0 %185
    %187 = vrot.lane.b32.xlu0 %v150, 64
    %v188 = vpop.permute.xlu0 %187
    %197 = vrot.lane.b32.xlu0 %v65, 64
    %v198 = vpop.permute.xlu0 %197
    %199 = vrot.lane.b32.xlu0 %v66, 64
    %v200 = vpop.permute.xlu0 %199
    %201 = vrot.lane.b32.xlu0 %v67, 64
    %v202 = vpop.permute.xlu0 %201
    %203 = vrot.lane.b32.xlu0 %v68, 64
    %v204 = vpop.permute.xlu0 %203
    %vm209 = vcmask 523264
    %v210 = vsel %vm209, %v160, %v182
    %v211 = vsel %vm209, %v161, %v184
    %v212 = vsel %vm209, %v162, %v186
    %v213 = vsel %vm209, %v163, %v188
    %v214 = vsel %vm209, %v173, %v198
    %v215 = vsel %vm209, %v174, %v200
    %v216 = vsel %vm209, %v175, %v202
    %v217 = vsel %vm209, %v176, %v204
    %v218 = vld [vmem:[#allocation5] sm:$0xff]
    %v219 = vld [vmem:[#allocation5 + $0x8] sm:$0xff]
    %v220 = vld [vmem:[#allocation5 + $0x10] sm:$0xff]
    %v221 = vld [vmem:[#allocation5 + $0x18] sm:$0xff]
    %v222 = vld [vmem:[#allocation5 + $0x20] sm:$0xff]
    %v223 = vld [vmem:[#allocation5 + $0x28] sm:$0xff]
    %v224 = vld [vmem:[#allocation5 + $0x30] sm:$0xff]
    %v225 = vld [vmem:[#allocation5 + $0x38] sm:$0xff]
    %v226 = vld [vmem:[#allocation5 + $0x40] sm:$0xff]
    %v227 = vld [vmem:[#allocation5 + $0x48] sm:$0xff]
    %v228 = vld [vmem:[#allocation5 + $0x50] sm:$0xff]
    %v229 = vld [vmem:[#allocation5 + $0x58] sm:$0xff]
    %v230 = vld [vmem:[#allocation5 + $0x60] sm:$0xff]
    %v231 = vld [vmem:[#allocation5 + $0x68] sm:$0xff]
    %v232 = vld [vmem:[#allocation5 + $0x70] sm:$0xff]
    %v233 = vld [vmem:[#allocation5 + $0x78] sm:$0xff]
    %v234 = vld [vmem:[#allocation5 + $0x80] sm:$0xff]
    %v235 = vld [vmem:[#allocation5 + $0x88] sm:$0xff]
    %v236 = vld [vmem:[#allocation5 + $0x90] sm:$0xff]
    %v237 = vld [vmem:[#allocation5 + $0x98] sm:$0xff]
    %v238 = vld [vmem:[#allocation5 + $0xa0] sm:$0xff]
    %v239 = vld [vmem:[#allocation5 + $0xa8] sm:$0xff]
    %v240 = vld [vmem:[#allocation5 + $0xb0] sm:$0xff]
    %v241 = vld [vmem:[#allocation5 + $0xb8] sm:$0xff]
    %v242 = vld [vmem:[#allocation5 + $0xc0] sm:$0xff]
    %v243 = vld [vmem:[#allocation5 + $0xc8] sm:$0xff]
    %v244 = vld [vmem:[#allocation5 + $0xd0] sm:$0xff]
    %v245 = vld [vmem:[#allocation5 + $0xd8] sm:$0xff]
    %v246 = vld [vmem:[#allocation5 + $0xe0] sm:$0xff]
    %v247 = vld [vmem:[#allocation5 + $0xe8] sm:$0xff]
    %v248 = vld [vmem:[#allocation5 + $0xf0] sm:$0xff]
    %v249 = vld [vmem:[#allocation5 + $0xf8] sm:$0xff]
    %v250 = vld [vmem:[#allocation5 + $0x100] sm:$0xff]
    %v251 = vld [vmem:[#allocation5 + $0x108] sm:$0xff]
    %v252 = vld [vmem:[#allocation5 + $0x110] sm:$0xff]
    %v253 = vld [vmem:[#allocation5 + $0x118] sm:$0xff]
    %v254 = vld [vmem:[#allocation5 + $0x120] sm:$0xff]
    %v255 = vld [vmem:[#allocation5 + $0x128] sm:$0xff]
    %v256 = vld [vmem:[#allocation5 + $0x130] sm:$0xff]
    %v257 = vld [vmem:[#allocation5 + $0x138] sm:$0xff]
    %v258 = vld [vmem:[#allocation5 + $0x140] sm:$0xff]
    %v259 = vld [vmem:[#allocation5 + $0x148] sm:$0xff]
    %v260 = vld [vmem:[#allocation5 + $0x150] sm:$0xff]
    %v261 = vld [vmem:[#allocation5 + $0x158] sm:$0xff]
    %v262 = vld [vmem:[#allocation5 + $0x160] sm:$0xff]
    %v263 = vld [vmem:[#allocation5 + $0x168] sm:$0xff]
    %v264 = vld [vmem:[#allocation5 + $0x170] sm:$0xff]
    %v265 = vld [vmem:[#allocation5 + $0x178] sm:$0xff]
    %v266 = vld [vmem:[#allocation5 + $0x180] sm:$0xff]
    %v267 = vld [vmem:[#allocation5 + $0x188] sm:$0xff]
    %v268 = vld [vmem:[#allocation5 + $0x190] sm:$0xff]
    %v269 = vld [vmem:[#allocation5 + $0x198] sm:$0xff]
    %v270 = vld [vmem:[#allocation5 + $0x1a0] sm:$0xff]
    %v271 = vld [vmem:[#allocation5 + $0x1a8] sm:$0xff]
    %v272 = vld [vmem:[#allocation5 + $0x1b0] sm:$0xff]
    %v273 = vld [vmem:[#allocation5 + $0x1b8] sm:$0xff]
    %v274 = vld [vmem:[#allocation5 + $0x1c0] sm:$0xff]
    %v275 = vld [vmem:[#allocation5 + $0x1c8] sm:$0xff]
    %v276 = vld [vmem:[#allocation5 + $0x1d0] sm:$0xff]
    %v277 = vld [vmem:[#allocation5 + $0x1d8] sm:$0xff]
    %v278 = vld [vmem:[#allocation5 + $0x1e0] sm:$0xff]
    %v279 = vld [vmem:[#allocation5 + $0x1e8] sm:$0xff]
    %v280 = vld [vmem:[#allocation5 + $0x1f0] sm:$0xff]
    %v281 = vld [vmem:[#allocation5 + $0x1f8] sm:$0xff]
    %282 = vmatpush.msra.mxu0 %v248
    %283 = vmatpush.msra.mxu0 %v246
    %284 = vmatpush.msra.mxu0 %v244
    %285 = vmatpush.msra.mxu0 %v242
    %286 = vmatpush.msra.mxu0 %v240
    %287 = vmatpush.msra.mxu0 %v238
    %288 = vmatpush.msra.mxu0 %v236
    %289 = vmatpush.msra.mxu0 %v234
    %290 = vmatpush.msra.mxu0 %v232
    %291 = vmatpush.msra.mxu0 %v230
    %292 = vmatpush.msra.mxu0 %v228
    %293 = vmatpush.msra.mxu0 %v226
    %294 = vmatpush.msra.mxu0 %v224
    %295 = vmatpush.msra.mxu0 %v222
    %296 = vmatpush.msra.mxu0 %v220
    %297 = vmatpush.msra.mxu0 %v218
    %298 = vmatmul.f32.gmra.mxu0 %v210
    %v299 = vpop.f32.mrf.mxu0
    %v300 = vadd.f32 0.0, %v299
    %301 = vmatmul.f32.gmra.mxu0 %v211
    %v302 = vpop.f32.mrf.mxu0
    %v303 = vadd.f32 0.0, %v302
    %304 = vmatmul.f32.gmra.mxu0 %v212
    %v305 = vpop.f32.mrf.mxu0
    %v306 = vadd.f32 0.0, %v305
    %307 = vmatmul.f32.gmra.mxu0 %v213
    %v308 = vpop.f32.mrf.mxu0
    %v309 = vadd.f32 0.0, %v308
    %310 = vdwg.mxu0
    %311 = vmatpush.msra.mxu0 %v280
    %312 = vmatpush.msra.mxu0 %v278
    %313 = vmatpush.msra.mxu0 %v276
    %314 = vmatpush.msra.mxu0 %v274
    %315 = vmatpush.msra.mxu0 %v272
    %316 = vmatpush.msra.mxu0 %v270
    %317 = vmatpush.msra.mxu0 %v268
    %318 = vmatpush.msra.mxu0 %v266
    %319 = vmatpush.msra.mxu0 %v264
    %320 = vmatpush.msra.mxu0 %v262
    %321 = vmatpush.msra.mxu0 %v260
    %322 = vmatpush.msra.mxu0 %v258
    %323 = vmatpush.msra.mxu0 %v256
    %324 = vmatpush.msra.mxu0 %v254
    %325 = vmatpush.msra.mxu0 %v252
    %326 = vmatpush.msra.mxu0 %v250
    %327 = vmatmul.f32.gmra.mxu0 %v214
    %v328 = vpop.f32.mrf.mxu0
    %v329 = vadd.f32 %v300, %v328
    %330 = vmatmul.f32.gmra.mxu0 %v215
    %v331 = vpop.f32.mrf.mxu0
    %v332 = vadd.f32 %v303, %v331
    %333 = vmatmul.f32.gmra.mxu0 %v216
    %v334 = vpop.f32.mrf.mxu0
    %v335 = vadd.f32 %v306, %v334
    %336 = vmatmul.f32.gmra.mxu0 %v217
    %v337 = vpop.f32.mrf.mxu0
    %v338 = vadd.f32 %v309, %v337
    %339 = vdwg.mxu0
    %340 = vmatpush.msra.mxu0 %v249
    %341 = vmatpush.msra.mxu0 %v247
    %342 = vmatpush.msra.mxu0 %v245
    %343 = vmatpush.msra.mxu0 %v243
    %344 = vmatpush.msra.mxu0 %v241
    %345 = vmatpush.msra.mxu0 %v239
    %346 = vmatpush.msra.mxu0 %v237
    %347 = vmatpush.msra.mxu0 %v235
    %348 = vmatpush.msra.mxu0 %v233
    %349 = vmatpush.msra.mxu0 %v231
    %350 = vmatpush.msra.mxu0 %v229
    %351 = vmatpush.msra.mxu0 %v227
    %352 = vmatpush.msra.mxu0 %v225
    %353 = vmatpush.msra.mxu0 %v223
    %354 = vmatpush.msra.mxu0 %v221
    %355 = vmatpush.msra.mxu0 %v219
    %356 = vmatmul.f32.gmra.mxu0 %v210
    %v357 = vpop.f32.mrf.mxu0
    %v358 = vadd.f32 0.0, %v357
    %359 = vmatmul.f32.gmra.mxu0 %v211
    %v360 = vpop.f32.mrf.mxu0
    %v361 = vadd.f32 0.0, %v360
    %362 = vmatmul.f32.gmra.mxu0 %v212
    %v363 = vpop.f32.mrf.mxu0
    %v364 = vadd.f32 0.0, %v363
    %365 = vmatmul.f32.gmra.mxu0 %v213
    %v366 = vpop.f32.mrf.mxu0
    %v367 = vadd.f32 0.0, %v366
    %368 = vdwg.mxu0
    %369 = vmatpush.msra.mxu0 %v281
    %370 = vmatpush.msra.mxu0 %v279
    %371 = vmatpush.msra.mxu0 %v277
    %372 = vmatpush.msra.mxu0 %v275
    %373 = vmatpush.msra.mxu0 %v273
    %374 = vmatpush.msra.mxu0 %v271
    %375 = vmatpush.msra.mxu0 %v269
    %376 = vmatpush.msra.mxu0 %v267
    %377 = vmatpush.msra.mxu0 %v265
    %378 = vmatpush.msra.mxu0 %v263
    %379 = vmatpush.msra.mxu0 %v261
    %380 = vmatpush.msra.mxu0 %v259
    %381 = vmatpush.msra.mxu0 %v257
    %382 = vmatpush.msra.mxu0 %v255
    %383 = vmatpush.msra.mxu0 %v253
    %384 = vmatpush.msra.mxu0 %v251
    %385 = vmatmul.f32.gmra.mxu0 %v214
    %v386 = vpop.f32.mrf.mxu0
    %v387 = vadd.f32 %v358, %v386
    %388 = vmatmul.f32.gmra.mxu0 %v215
    %v389 = vpop.f32.mrf.mxu0
    %v390 = vadd.f32 %v361, %v389
    %391 = vmatmul.f32.gmra.mxu0 %v216
    %v392 = vpop.f32.mrf.mxu0
    %v393 = vadd.f32 %v364, %v392
    %394 = vmatmul.f32.gmra.mxu0 %v217
    %v395 = vpop.f32.mrf.mxu0
    %v396 = vadd.f32 %v367, %v395
    %397 = vdwg.mxu0
    %v398 = vperm.slane %v69, 0
    %v399 = vadd.f32 %v329, %v398
    %v400 = vadd.f32 %v332, %v398
    %v401 = vadd.f32 %v335, %v398
    %v402 = vadd.f32 %v338, %v398
    %v403 = vmax.f32 %v399, 0.0
    %v404 = vmax.f32 %v400, 0.0
    %v405 = vmax.f32 %v401, 0.0
    %v406 = vmax.f32 %v402, 0.0
    %v407 = vrot.slane %v403, 7
    %v408 = vrot.slane %v404, 7
    %v409 = vrot.slane %v405, 7
    %v410 = vrot.slane %v406, 7
    %v411 = vsel %vm155, %v409, %v410
    %v412 = vsel %vm155, %v408, %v409
    %v413 = vsel %vm155, %v407, %v408
    %v414 = vsel %vm155, %v410, %v407
    %v415 = vmul.f32 %v414, %v131
    %v416 = vmul.f32 %v413, %v132
    %v417 = vmul.f32 %v412, %v133
    %v418 = vmul.f32 %v411, %v134
    %v419 = vrot.slane %v403, 1
    %v420 = vrot.slane %v404, 1
    %v421 = vrot.slane %v405, 1
    %v422 = vrot.slane %v406, 1
    %v423 = vsel %vm168, %v421, %v422
    %v424 = vsel %vm168, %v420, %v421
    %v425 = vsel %vm168, %v419, %v420
    %v426 = vsel %vm168, %v422, %v419
    %v427 = vmul.f32 %v425, %v143
    %v428 = vmul.f32 %v424, %v144
    %v429 = vmul.f32 %v423, %v145
    %v430 = vmul.f32 %v426, %v146
    %v431 = vld [vmem:[#allocation7] sm:$0xff]
    %v432 = vld [vmem:[#allocation7 + $0x8] sm:$0xff]
    %v433 = vld [vmem:[#allocation7 + $0x10] sm:$0xff]
    %v434 = vld [vmem:[#allocation7 + $0x18] sm:$0xff]
    %v435 = vld [vmem:[#allocation7 + $0x20] sm:$0xff]
    %v436 = vld [vmem:[#allocation7 + $0x28] sm:$0xff]
    %v437 = vld [vmem:[#allocation7 + $0x30] sm:$0xff]
    %v438 = vld [vmem:[#allocation7 + $0x38] sm:$0xff]
    %v439 = vld [vmem:[#allocation7 + $0x40] sm:$0xff]
    %v440 = vld [vmem:[#allocation7 + $0x48] sm:$0xff]
    %v441 = vld [vmem:[#allocation7 + $0x50] sm:$0xff]
    %v442 = vld [vmem:[#allocation7 + $0x58] sm:$0xff]
    %v443 = vld [vmem:[#allocation7 + $0x60] sm:$0xff]
    %v444 = vld [vmem:[#allocation7 + $0x68] sm:$0xff]
    %v445 = vld [vmem:[#allocation7 + $0x70] sm:$0xff]
    %v446 = vld [vmem:[#allocation7 + $0x78] sm:$0xff]
    %v447 = vld [vmem:[#allocation7 + $0x80] sm:$0xff]
    %v448 = vld [vmem:[#allocation7 + $0x88] sm:$0xff]
    %v449 = vld [vmem:[#allocation7 + $0x90] sm:$0xff]
    %v450 = vld [vmem:[#allocation7 + $0x98] sm:$0xff]
    %v451 = vld [vmem:[#allocation7 + $0xa0] sm:$0xff]
    %v452 = vld [vmem:[#allocation7 + $0xa8] sm:$0xff]
    %v453 = vld [vmem:[#allocation7 + $0xb0] sm:$0xff]
    %v454 = vld [vmem:[#allocation7 + $0xb8] sm:$0xff]
    %v455 = vld [vmem:[#allocation7 + $0xc0] sm:$0xff]
    %v456 = vld [vmem:[#allocation7 + $0xc8] sm:$0xff]
    %v457 = vld [vmem:[#allocation7 + $0xd0] sm:$0xff]
    %v458 = vld [vmem:[#allocation7 + $0xd8] sm:$0xff]
    %v459 = vld [vmem:[#allocation7 + $0xe0] sm:$0xff]
    %v460 = vld [vmem:[#allocation7 + $0xe8] sm:$0xff]
    %v461 = vld [vmem:[#allocation7 + $0xf0] sm:$0xff]
    %v462 = vld [vmem:[#allocation7 + $0xf8] sm:$0xff]
    %v463 = vld [vmem:[#allocation7 + $0x100] sm:$0xff]
    %v464 = vld [vmem:[#allocation7 + $0x108] sm:$0xff]
    %v465 = vld [vmem:[#allocation7 + $0x110] sm:$0xff]
    %v466 = vld [vmem:[#allocation7 + $0x118] sm:$0xff]
    %v467 = vld [vmem:[#allocation7 + $0x120] sm:$0xff]
    %v468 = vld [vmem:[#allocation7 + $0x128] sm:$0xff]
    %v469 = vld [vmem:[#allocation7 + $0x130] sm:$0xff]
    %v470 = vld [vmem:[#allocation7 + $0x138] sm:$0xff]
    %v471 = vld [vmem:[#allocation7 + $0x140] sm:$0xff]
    %v472 = vld [vmem:[#allocation7 + $0x148] sm:$0xff]
    %v473 = vld [vmem:[#allocation7 + $0x150] sm:$0xff]
    %v474 = vld [vmem:[#allocation7 + $0x158] sm:$0xff]
    %v475 = vld [vmem:[#allocation7 + $0x160] sm:$0xff]
    %v476 = vld [vmem:[#allocation7 + $0x168] sm:$0xff]
    %v477 = vld [vmem:[#allocation7 + $0x170] sm:$0xff]
    %v478 = vld [vmem:[#allocation7 + $0x178] sm:$0xff]
    %479 = vmatpush.msra.mxu0 %v446
    %480 = vmatpush.msra.mxu0 %v445
    %481 = vmatpush.msra.mxu0 %v444
    %482 = vmatpush.msra.mxu0 %v443
    %483 = vmatpush.msra.mxu0 %v442
    %484 = vmatpush.msra.mxu0 %v441
    %485 = vmatpush.msra.mxu0 %v440
    %486 = vmatpush.msra.mxu0 %v439
    %487 = vmatpush.msra.mxu0 %v438
    %488 = vmatpush.msra.mxu0 %v437
    %489 = vmatpush.msra.mxu0 %v436
    %490 = vmatpush.msra.mxu0 %v435
    %491 = vmatpush.msra.mxu0 %v434
    %492 = vmatpush.msra.mxu0 %v433
    %493 = vmatpush.msra.mxu0 %v432
    %494 = vmatpush.msra.mxu0 %v431
    %495 = vmatmul.f32.gmra.mxu0 %v415
    %v496 = vpop.f32.mrf.mxu0
    %v497 = vadd.f32 %v387, %v496
    %498 = vmatmul.f32.gmra.mxu0 %v416
    %v499 = vpop.f32.mrf.mxu0
    %v500 = vadd.f32 %v390, %v499
    %501 = vmatmul.f32.gmra.mxu0 %v417
    %v502 = vpop.f32.mrf.mxu0
    %v503 = vadd.f32 %v393, %v502
    %504 = vmatmul.f32.gmra.mxu0 %v418
    %v505 = vpop.f32.mrf.mxu0
    %v506 = vadd.f32 %v396, %v505
    %507 = vdwg.mxu0
    %508 = vmatpush.msra.mxu0 %v462
    %509 = vmatpush.msra.mxu0 %v461
    %510 = vmatpush.msra.mxu0 %v460
    %511 = vmatpush.msra.mxu0 %v459
    %512 = vmatpush.msra.mxu0 %v458
    %513 = vmatpush.msra.mxu0 %v457
    %514 = vmatpush.msra.mxu0 %v456
    %515 = vmatpush.msra.mxu0 %v455
    %516 = vmatpush.msra.mxu0 %v454
    %517 = vmatpush.msra.mxu0 %v453
    %518 = vmatpush.msra.mxu0 %v452
    %519 = vmatpush.msra.mxu0 %v451
    %520 = vmatpush.msra.mxu0 %v450
    %521 = vmatpush.msra.mxu0 %v449
    %522 = vmatpush.msra.mxu0 %v448
    %523 = vmatpush.msra.mxu0 %v447
    %524 = vmatmul.f32.gmra.mxu0 %v403
    %v525 = vpop.f32.mrf.mxu0
    %v526 = vadd.f32 %v497, %v525
    %527 = vmatmul.f32.gmra.mxu0 %v404
    %v528 = vpop.f32.mrf.mxu0
    %v529 = vadd.f32 %v500, %v528
    %530 = vmatmul.f32.gmra.mxu0 %v405
    %v531 = vpop.f32.mrf.mxu0
    %v532 = vadd.f32 %v503, %v531
    %533 = vmatmul.f32.gmra.mxu0 %v406
    %v534 = vpop.f32.mrf.mxu0
    %v535 = vadd.f32 %v506, %v534
    %536 = vdwg.mxu0
    %537 = vmatpush.msra.mxu0 %v478
    %538 = vmatpush.msra.mxu0 %v477
    %539 = vmatpush.msra.mxu0 %v476
    %540 = vmatpush.msra.mxu0 %v475
    %541 = vmatpush.msra.mxu0 %v474
    %542 = vmatpush.msra.mxu0 %v473
    %543 = vmatpush.msra.mxu0 %v472
    %544 = vmatpush.msra.mxu0 %v471
    %545 = vmatpush.msra.mxu0 %v470
    %546 = vmatpush.msra.mxu0 %v469
    %547 = vmatpush.msra.mxu0 %v468
    %548 = vmatpush.msra.mxu0 %v467
    %549 = vmatpush.msra.mxu0 %v466
    %550 = vmatpush.msra.mxu0 %v465
    %551 = vmatpush.msra.mxu0 %v464
    %552 = vmatpush.msra.mxu0 %v463
    %553 = vmatmul.f32.gmra.mxu0 %v427
    %v554 = vpop.f32.mrf.mxu0
    %v555 = vadd.f32 %v526, %v554
    %556 = vmatmul.f32.gmra.mxu0 %v428
    %v557 = vpop.f32.mrf.mxu0
    %v558 = vadd.f32 %v529, %v557
    %559 = vmatmul.f32.gmra.mxu0 %v429
    %v560 = vpop.f32.mrf.mxu0
    %v561 = vadd.f32 %v532, %v560
    %562 = vmatmul.f32.gmra.mxu0 %v430
    %v563 = vpop.f32.mrf.mxu0
    %v564 = vadd.f32 %v535, %v563
    %565 = vdwg.mxu0
    %v566 = vperm.slane %v69, 1
    %v567 = vadd.f32 %v555, %v566
    %v568 = vadd.f32 %v558, %v566
    %v569 = vadd.f32 %v561, %v566
    %v570 = vadd.f32 %v564, %v566
    %571 = vst [vmem:[#allocation8] sm:$0xff] %v567
    %572 = vst [vmem:[#allocation8 + $0x8] sm:$0xff] %v568
    %573 = vst [vmem:[#allocation8 + $0x10] sm:$0xff] %v569
    %574 = vst [vmem:[#allocation8 + $0x18] sm:$0xff] %v570
    // Predicated region
    $region30: #{tpu_custom_call.1} parent=1 // pred_check
      _
    $region31: #{tpu_custom_call.1} parent=1 // pred_check_branch
      %576 = sbr.rel (0) target = $region33
    $region32: #{tpu_custom_call.1} parent=1 // pred_region
      %578 = vsyncadd [#allocation4], 0
      %s579 = sshll.u32 [#allocation8], 4
      %s580 = int_to_ptr.vmem [resolvable:$true] %s579
      %s581 = sshll.u32 %s4, 4
      %s582 = int_to_ptr.hbm [resolvable:$true] %s581
      %587 = dma.vmem_to_hbm [thread:$0]  %s580, 512, %s582, [#allocation4], 128, 128, 8
    $region33: #{tpu_custom_call.1} parent=1 // pred_fallthru
      _
    // Predicated region
    $region34: #{tpu_custom_call.1} parent=1 // pred_check
      _
    $region35: #{tpu_custom_call.1} parent=1 // pred_check_branch
      %589 = sbr.rel (0) target = $region37
    $region36: #{tpu_custom_call.1} parent=1 // pred_region
      %591 = dma.done [#allocation4], 512
    $region37: #{tpu_custom_call.1} parent=1 // pred_fallthru
      _
    %592 = vsyncpa [#allocation3], 1
    %593 = vsyncpa [#allocation6], 1
    %594 = vsyncpa [#allocation4], 1

</llo_original>
